<compile_context>
chip_gen: v7x
topology: tpu7x:2x2x1
jax: 0.10.0
libtpu: 0.0.40
codegen_flags: <defaults>
</compile_context>

<pallas_src>
import functools

import jax
import jax.numpy as jnp
from jax.experimental import pallas as pl
from jax.experimental.pallas import tpu as pltpu

_PANEL = 128              # MXU-native panel width along time (lanes)
_MAX_T_CHUNK = 4 * _PANEL  # 512 lanes per DMA block
_MAX_ROW_TILE = 512        # rows per block (multiple of 8)


def _cdiv(a, b):
    return (a + b - 1) // b


def _round_up(a, b):
    return _cdiv(a, b) * b


def _pcen_leaf_kernel(params_ref, utri_ref, x_ref, o_ref, carry_ref, *,
                      eps, t_chunk, total_t):
    """One (row-tile, time-chunk) grid step.

    params_ref : (tN, 8) f32 per-row constants:
                 [log(1-s), 1-s, 1/s, alpha, delta, r, delta**r, 0]
    utri_ref   : (128, 128) bf16 upper-triangular ones (exact), constant.
    x_ref/o_ref: (tN, t_chunk) f32; rows = flattened (batch, channel),
                 lanes = time (lane-dense loads/stores).
    carry_ref  : (tN, 1) f32 scratch, running sum_{k<t0} x_k (1-s)^k.
    """
    k = pl.program_id(1)

    @pl.when(k == 0)
    def _init():
        carry_ref[...] = jnp.zeros_like(carry_ref)

    # per-row constants (tN, 1); broadcast against (1, w)/(tN, w) below
    log_q = params_ref[:, 0:1]      # log(1 - s)
    q     = params_ref[:, 1:2]      # 1 - s
    inv_s = params_ref[:, 2:3]      # 1 / s
    alpha = params_ref[:, 3:4]
    delta = params_ref[:, 4:5]
    r     = params_ref[:, 5:6]
    d_r   = params_ref[:, 6:7]      # delta ** r

    utri = utri_ref[...]                                    # (128, 128) bf16
    iota = jax.lax.broadcasted_iota(jnp.int32, (1, _PANEL), 1)
    carry = carry_ref[...]                                   # (tN, 1) f32
    t0 = k * t_chunk
    needs_mask = (total_t % t_chunk) != 0                    # static (Python)

    # static panel decomposition of the time chunk; the last panel is ragged
    # only when the chunk covers the whole (short) time axis.
    off = 0
    while off < t_chunk:
        w = min(_PANEL, t_chunk - off)

        x = jnp.maximum(x_ref[:, off:off + w], 0.0)          # (tN, w)
        t_idx = iota[:, :w] + (t0 + off)                     # (1, w) abs time
        if needs_mask:
            # zero the padded tail lanes of the (partial) last time chunk so
            # garbage can never reach the prefix-sum matmul or the carry
            x = jnp.where(t_idx < total_t, x, 0.0)

        decay = jnp.exp(t_idx.astype(jnp.float32) * log_q)   # (1-s)**t, (tN,w)
        xd = x * decay

        # in-panel prefix sum on the MXU: bf16 hi/lo split (combined ~16-bit
        # mantissa, rel err ~1e-5) against an exact bf16 upper-triangular
        # ones matrix, f32 accumulation -> single-pass bf16 matmuls instead
        # of emulated multi-pass f32.
        xd_hi = xd.astype(jnp.bfloat16)
        xd_lo = (xd - xd_hi.astype(jnp.float32)).astype(jnp.bfloat16)
        u = utri if w == _PANEL else utri[:w, :w]
        num = (jnp.dot(xd_hi, u, preferred_element_type=jnp.float32)
               + jnp.dot(xd_lo, u, preferred_element_type=jnp.float32)
               + carry)
        carry = num[:, w - 1:w]

        # weight cumsum closed form: sum_{k<=t} (1-s)**k = (1 - (1-s)**(t+1))/s
        den = (1.0 - decay * q) * inv_s

        # NOTE: exact divide kept deliberately (approx vrcp ~1e-4 rel error
        # would eat the whole accuracy budget of the 1e-4 tolerance).
        m = num / (den + eps)
        norm = x * jnp.exp(-alpha * jnp.log(m + eps))        # x / (eps+M)**alpha
        o_ref[:, off:off + w] = jnp.exp(r * jnp.log(norm + delta)) - d_r

        off += w

    carry_ref[...] = carry


def pcen_leaf_adaptation(x, alpha, delta, r, smoothing_coef, *, eps=1e-6):
    """x: (B, C, T).  alpha/delta/r: (C,).  smoothing_coef: (C,) or scalar."""
    B, C, T = x.shape
    N = B * C

    def per_row(p):
        p = jnp.asarray(p, jnp.float32).reshape(-1)
        p = jnp.broadcast_to(p, (C,))
        return jnp.tile(p, B)                                # row = b*C + c

    s = jnp.clip(per_row(smoothing_coef), 1e-5, 1.0)
    q = 1.0 - s
    log_q = jnp.log(jnp.maximum(q, 1e-30))                   # guard s == 1
    inv_s = 1.0 / s
    a_row = per_row(alpha)
    d_row = per_row(delta)
    r_row = per_row(r)
    dr_row = jnp.power(d_row, r_row)
    params = jnp.stack(
        [log_q, q, inv_s, a_row, d_row, r_row, dr_row, jnp.zeros_like(s)],
        axis=1)                                              # (N, 8), narrow

    # --- time tiling (lane axis) ---
    if T <= _MAX_T_CHUNK:
        t_chunk = T            # full-dim block: no pad, no partial time block
    else:
        t_chunk = _MAX_T_CHUNK  # ragged last chunk masked in-kernel
    n_tchunks = _cdiv(T, t_chunk)

    # --- row tiling (sublane axis) ---
    if N < 256:
        tN = N                                   # full-dim block
    elif N < 2 * _MAX_ROW_TILE:
        tN = _round_up(_cdiv(N, 2), 8)           # 2 tiles -> v7x megacore split
    else:
        tN = _MAX_ROW_TILE
    n_rtiles = _cdiv(N, tN)

    x2 = x.reshape(N, T).astype(jnp.float32)     # metadata-only reshape
    utri = jnp.triu(jnp.ones((_PANEL, _PANEL), jnp.bfloat16))  # exact in bf16

    kernel = functools.partial(_pcen_leaf_kernel, eps=float(eps),
                               t_chunk=t_chunk, total_t=T)

    out = pl.pallas_call(
        kernel,
        out_shape=jax.ShapeDtypeStruct((N, T), jnp.float32),
        grid_spec=pltpu.PrefetchScalarGridSpec(
            num_scalar_prefetch=0,
            grid=(n_rtiles, n_tchunks),
            in_specs=[
                pl.BlockSpec((tN, 8), lambda i, k: (i, 0)),           # params
                pl.BlockSpec((_PANEL, _PANEL), lambda i, k: (0, 0)),  # utri
                pl.BlockSpec((tN, t_chunk), lambda i, k: (i, k)),     # x
            ],
            out_specs=pl.BlockSpec((tN, t_chunk), lambda i, k: (i, k)),
            scratch_shapes=[pltpu.VMEM((tN, 1), jnp.float32)],        # carry
        ),
        compiler_params=pltpu.CompilerParams(
            dimension_semantics=("parallel", "arbitrary"),
            vmem_limit_bytes=48 * 1024 * 1024),
    )(params, utri, x2)

    return out.reshape(B, C, T)


def _reference(x, alpha, delta, r, smoothing_coef, eps=1e-6):
    """Pure-JAX reference matching the PyTorch forward semantics."""
    B, C, T = x.shape
    x = jnp.maximum(x, 0.0)

    def chan(p):
        p = jnp.asarray(p, jnp.float32).reshape(-1)
        return jnp.broadcast_to(p, (C,)).reshape(1, C, 1)

    alpha = chan(alpha)
    delta = chan(delta)
    r = chan(r)
    smoothing = jnp.clip(chan(smoothing_coef), 1e-5, 1.0)
    one_minus_s = 1.0 - smoothing
    time_idx = jnp.arange(T, dtype=jnp.float32).reshape(1, 1, T)
    decay = one_minus_s ** time_idx
    x_cumsum = jnp.cumsum(x * decay, axis=-1)
    w_cumsum = jnp.cumsum(jnp.broadcast_to(decay, (B, C, T)), axis=-1)
    M = x_cumsum / (w_cumsum + eps)
    norm = x / (eps + M) ** alpha
    return (norm + delta) ** r - delta ** r


if __name__ == "__main__":
    eps = 1e-6

    # --- small config consistent with (batch, n_filters, time) ---
    B, C, T = 2, 4, 16
    alpha = jnp.full((C,), 0.98, jnp.float32)
    delta = jnp.full((C,), 2.0, jnp.float32)
    r = jnp.full((C,), 0.5, jnp.float32)
    smoothing = jnp.full((C,), 0.025, jnp.float32)
    x = jax.random.normal(jax.random.PRNGKey(0), (B, C, T), dtype=jnp.float32)

    y = jax.block_until_ready(
        pcen_leaf_adaptation(x, alpha, delta, r, smoothing, eps=eps))
    y_ref = _reference(x, alpha, delta, r, smoothing, eps=eps)
    assert y.shape == x.shape
    assert jnp.allclose(y, y_ref, atol=1e-4, rtol=1e-4), \
        float(jnp.max(jnp.abs(y - y_ref)))

    # --- ragged rows (N=10), ragged time, multi-panel single chunk ---
    B2, C2, T2 = 2, 5, 300
    alpha2 = jnp.linspace(0.90, 0.99, C2).astype(jnp.float32)
    delta2 = jnp.full((C2,), 2.0, jnp.float32)
    r2 = jnp.full((C2,), 0.5, jnp.float32)
    smoothing2 = jnp.linspace(0.02, 0.08, C2).astype(jnp.float32)
    x2 = jax.random.normal(jax.random.PRNGKey(1), (B2, C2, T2), jnp.float32)
    y2 = jax.block_until_ready(
        pcen_leaf_adaptation(x2, alpha2, delta2, r2, smoothing2, eps=eps))
    y2_ref = _reference(x2, alpha2, delta2, r2, smoothing2, eps=eps)
    assert jnp.allclose(y2, y2_ref, atol=1e-4, rtol=1e-4), \
        float(jnp.max(jnp.abs(y2 - y2_ref)))

    # --- multi-chunk time (exercises the cross-chunk carry), ragged last
    #     chunk, scalar smoothing (per_channel_smoothing=False path) ---
    B3, C3, T3 = 2, 3, 700
    alpha3 = jnp.full((C3,), 0.96, jnp.float32)
    delta3 = jnp.full((C3,), 2.0, jnp.float32)
    r3 = jnp.full((C3,), 0.5, jnp.float32)
    smoothing3 = jnp.float32(0.04)
    x3 = jax.random.normal(jax.random.PRNGKey(2), (B3, C3, T3), jnp.float32)
    y3 = jax.block_until_ready(
        pcen_leaf_adaptation(x3, alpha3, delta3, r3, smoothing3, eps=eps))
    y3_ref = _reference(x3, alpha3, delta3, r3, smoothing3, eps=eps)
    assert jnp.allclose(y3, y3_ref, atol=1e-4, rtol=1e-4), \
        float(jnp.max(jnp.abs(y3 - y3_ref)))

    print("KERNEL_OK")
</pallas_src>

<mosaic_0001>
module attributes {stable_mosaic.version = 11 : i64} {
  func.func @_pcen_leaf_kernel(%arg0: i32, %arg1: i32, %arg2: memref<8x8xf32, #tpu.memory_space<vmem>>, %arg3: memref<128x128xbf16, #tpu.memory_space<vmem>>, %arg4: memref<8x16xf32, #tpu.memory_space<vmem>>, %arg5: memref<8x16xf32, #tpu.memory_space<vmem>>, %arg6: memref<8x1xf32, #tpu.memory_space<vmem>>) attributes {dimension_semantics = [#tpu.dimension_semantics<parallel>, #tpu.dimension_semantics<arbitrary>], iteration_bounds = array<i64: 1, 1>, scalar_prefetch = 0 : i64, scratch_operands = 1 : i64, tpu.core_type = #tpu.core_type<tc>, window_params = [{transform_indices = @transform_0, window_bounds = array<i64: 8, 8>}, {pipeline_mode = #tpu.pipeline_mode<synchronous>, transform_indices = @transform_1, window_bounds = array<i64: 128, 128>}, {transform_indices = @transform_2, window_bounds = array<i64: 8, 16>}, {transform_indices = @transform_3, window_bounds = array<i64: 8, 16>}]} {
    %c0_i32 = arith.constant 0 : i32
    %0 = arith.cmpi eq, %arg1, %c0_i32 : i32
    %1 = arith.extui %0 : i1 to i32
    %c0_i32_0 = arith.constant 0 : i32
    %2 = arith.cmpi ne, %1, %c0_i32_0 : i32
    scf.if %2 {
      %cst_25 = arith.constant 0.000000e+00 : f32
      %66 = vector.broadcast %cst_25 : f32 to vector<8x1xf32>
      %c0_26 = arith.constant 0 : index
      %c0_27 = arith.constant 0 : index
      %67 = vector.load %arg6[%c0_26, %c0_27] : memref<8x1xf32, #tpu.memory_space<vmem>>, vector<8x1xf32>
      tpu.vector_store %arg6[%c0_26, %c0_27], %66 {strides = array<i32>} : memref<8x1xf32, #tpu.memory_space<vmem>>, vector<8x1xf32>,
    } else {
    }
    %c0 = arith.constant 0 : index
    %c0_1 = arith.constant 0 : index
    %3 = vector.load %arg2[%c0, %c0_1] : memref<8x8xf32, #tpu.memory_space<vmem>>, vector<8x1xf32>
    %c0_2 = arith.constant 0 : index
    %c1 = arith.constant 1 : index
    %4 = vector.load %arg2[%c0_2, %c1] : memref<8x8xf32, #tpu.memory_space<vmem>>, vector<8x1xf32>
    %c0_3 = arith.constant 0 : index
    %c2 = arith.constant 2 : index
    %5 = vector.load %arg2[%c0_3, %c2] : memref<8x8xf32, #tpu.memory_space<vmem>>, vector<8x1xf32>
    %c0_4 = arith.constant 0 : index
    %c3 = arith.constant 3 : index
    %6 = vector.load %arg2[%c0_4, %c3] : memref<8x8xf32, #tpu.memory_space<vmem>>, vector<8x1xf32>
    %c0_5 = arith.constant 0 : index
    %c4 = arith.constant 4 : index
    %7 = vector.load %arg2[%c0_5, %c4] : memref<8x8xf32, #tpu.memory_space<vmem>>, vector<8x1xf32>
    %c0_6 = arith.constant 0 : index
    %c5 = arith.constant 5 : index
    %8 = vector.load %arg2[%c0_6, %c5] : memref<8x8xf32, #tpu.memory_space<vmem>>, vector<8x1xf32>
    %c0_7 = arith.constant 0 : index
    %c6 = arith.constant 6 : index
    %9 = vector.load %arg2[%c0_7, %c6] : memref<8x8xf32, #tpu.memory_space<vmem>>, vector<8x1xf32>
    %c0_8 = arith.constant 0 : index
    %c0_9 = arith.constant 0 : index
    %10 = vector.load %arg3[%c0_8, %c0_9] : memref<128x128xbf16, #tpu.memory_space<vmem>>, vector<128x128xbf16>
    %11 = tpu.iota {dimensions = array<i32: 1>} : vector<1x128xi32>
    %c0_10 = arith.constant 0 : index
    %c0_11 = arith.constant 0 : index
    %12 = vector.load %arg6[%c0_10, %c0_11] : memref<8x1xf32, #tpu.memory_space<vmem>>, vector<8x1xf32>
    %c16_i32 = arith.constant 16 : i32
    %13 = arith.muli %arg1, %c16_i32 : i32
    %c0_12 = arith.constant 0 : index
    %c0_13 = arith.constant 0 : index
    %14 = vector.load %arg4[%c0_12, %c0_13] : memref<8x16xf32, #tpu.memory_space<vmem>>, vector<8x16xf32>
    %cst = arith.constant 0.000000e+00 : f32
    %15 = vector.broadcast %cst : f32 to vector<8x16xf32>
    %16 = arith.maximumf %14, %15 : vector<8x16xf32>
    %17 = vector.extract_strided_slice %11 {offsets = [0, 0], sizes = [1, 16], strides = [1, 1]} : vector<1x128xi32> to vector<1x16xi32>
    %c0_i32_14 = arith.constant 0 : i32
    %18 = arith.addi %13, %c0_i32_14 : i32
    %19 = vector.broadcast %18 : i32 to vector<1x16xi32>
    %20 = arith.addi %17, %19 : vector<1x16xi32>
    %21 = arith.sitofp %20 : vector<1x16xi32> to vector<1x16xf32>
    %22 = vector.broadcast %21 : vector<1x16xf32> to vector<8x16xf32>
    %23 = vector.broadcast %3 : vector<8x1xf32> to vector<8x16xf32>
    %24 = arith.mulf %22, %23 : vector<8x16xf32>
    %25 = math.exp %24 : vector<8x16xf32>
    %26 = arith.mulf %16, %25 : vector<8x16xf32>
    %27 = arith.truncf %26 : vector<8x16xf32> to vector<8x16xbf16>
    %28 = arith.extf %27 : vector<8x16xbf16> to vector<8x16xf32>
    %29 = arith.subf %26, %28 : vector<8x16xf32>
    %30 = arith.truncf %29 : vector<8x16xf32> to vector<8x16xbf16>
    %31 = vector.extract_strided_slice %10 {offsets = [0, 0], sizes = [16, 16], strides = [1, 1]} : vector<128x128xbf16> to vector<16x16xbf16>
    %cst_15 = arith.constant dense<0.000000e+00> : vector<8x16xf32>
    %32 = tpu.matmul %27, %31, %cst_15 {dimension_numbers = #tpu.dot_dimension_numbers<[1], [0], [0], [1], [0, 0, 1, 1], [], []>} : vector<8x16xbf16>, vector<16x16xbf16>, vector<8x16xf32> -> vector<8x16xf32>
    %cst_16 = arith.constant dense<0.000000e+00> : vector<8x16xf32>
    %33 = tpu.matmul %30, %31, %cst_16 {dimension_numbers = #tpu.dot_dimension_numbers<[1], [0], [0], [1], [0, 0, 1, 1], [], []>} : vector<8x16xbf16>, vector<16x16xbf16>, vector<8x16xf32> -> vector<8x16xf32>
    %34 = arith.addf %32, %33 : vector<8x16xf32>
    %35 = vector.broadcast %12 : vector<8x1xf32> to vector<8x16xf32>
    %36 = arith.addf %34, %35 : vector<8x16xf32>
    %37 = vector.extract_strided_slice %36 {offsets = [0, 15], sizes = [8, 1], strides = [1, 1]} : vector<8x16xf32> to vector<8x1xf32>
    %38 = vector.broadcast %4 : vector<8x1xf32> to vector<8x16xf32>
    %39 = arith.mulf %25, %38 : vector<8x16xf32>
    %cst_17 = arith.constant 1.000000e+00 : f32
    %40 = vector.broadcast %cst_17 : f32 to vector<8x16xf32>
    %41 = arith.subf %40, %39 : vector<8x16xf32>
    %42 = vector.broadcast %5 : vector<8x1xf32> to vector<8x16xf32>
    %43 = arith.mulf %41, %42 : vector<8x16xf32>
    %cst_18 = arith.constant 9.99999997E-7 : f32
    %44 = vector.broadcast %cst_18 : f32 to vector<8x16xf32>
    %45 = arith.addf %43, %44 : vector<8x16xf32>
    %46 = arith.divf %36, %45 : vector<8x16xf32>
    %cst_19 = arith.constant 0.000000e+00 : f32
    %47 = vector.broadcast %cst_19 : f32 to vector<8x1xf32>
    %48 = arith.subf %47, %6 : vector<8x1xf32>
    %cst_20 = arith.constant 9.99999997E-7 : f32
    %49 = vector.broadcast %cst_20 : f32 to vector<8x16xf32>
    %50 = arith.addf %46, %49 : vector<8x16xf32>
    %51 = math.log %50 : vector<8x16xf32>
    %52 = vector.broadcast %48 : vector<8x1xf32> to vector<8x16xf32>
    %53 = arith.mulf %52, %51 : vector<8x16xf32>
    %54 = math.exp %53 : vector<8x16xf32>
    %55 = arith.mulf %16, %54 : vector<8x16xf32>
    %56 = vector.broadcast %7 : vector<8x1xf32> to vector<8x16xf32>
    %57 = arith.addf %55, %56 : vector<8x16xf32>
    %58 = math.log %57 : vector<8x16xf32>
    %59 = vector.broadcast %8 : vector<8x1xf32> to vector<8x16xf32>
    %60 = arith.mulf %59, %58 : vector<8x16xf32>
    %61 = math.exp %60 : vector<8x16xf32>
    %62 = vector.broadcast %9 : vector<8x1xf32> to vector<8x16xf32>
    %63 = arith.subf %61, %62 : vector<8x16xf32>
    %c0_21 = arith.constant 0 : index
    %c0_22 = arith.constant 0 : index
    %64 = vector.load %arg5[%c0_21, %c0_22] : memref<8x16xf32, #tpu.memory_space<vmem>>, vector<8x16xf32>
    tpu.vector_store %arg5[%c0_21, %c0_22], %63 {strides = array<i32>} : memref<8x16xf32, #tpu.memory_space<vmem>>, vector<8x16xf32>,
    %c0_23 = arith.constant 0 : index
    %c0_24 = arith.constant 0 : index
    %65 = vector.load %arg6[%c0_23, %c0_24] : memref<8x1xf32, #tpu.memory_space<vmem>>, vector<8x1xf32>
    tpu.vector_store %arg6[%c0_23, %c0_24], %37 {strides = array<i32>} : memref<8x1xf32, #tpu.memory_space<vmem>>, vector<8x1xf32>,
    return
  }
  func.func @transform_0(%arg0: i32, %arg1: i32) -> (i32, i32) {
    %c0_i32 = arith.constant 0 : i32
    %c0_i32_0 = arith.constant 0 : i32
    return %arg0, %c0_i32 : i32, i32
  }
  func.func @transform_1(%arg0: i32, %arg1: i32) -> (i32, i32) {
    %c0_i32 = arith.constant 0 : i32
    %c0_i32_0 = arith.constant 0 : i32
    %c0_i32_1 = arith.constant 0 : i32
    return %c0_i32, %c0_i32_0 : i32, i32
  }
  func.func @transform_2(%arg0: i32, %arg1: i32) -> (i32, i32) {
    %c0_i32 = arith.constant 0 : i32
    return %arg0, %arg1 : i32, i32
  }
  func.func @transform_3(%arg0: i32, %arg1: i32) -> (i32, i32) {
    %c0_i32 = arith.constant 0 : i32
    return %arg0, %arg1 : i32, i32
  }
}

</mosaic_0001>

<llo_original>
// kernel: tpu_custom_call.1
$region0: #{tpu_custom_call.1}
  #allocation0 [shape = 'u32[]', space=smem, size = 0x4, offset = 0x4, fixed_abs, tag = 'smem constant byte address 0x4 - core index']
  #allocation1 [shape = 'u32[144,128]{1,0:T(1,128)}', space=vmem, size = 0x12000, scoped, tag = 'internal scratch']
  #allocation2 [shape = 'f32[8,1]{1,0:T(8,128)}', space=vmem, size = 0x1000, scoped, tag = 'scratch operand']
  %s0 = inlined_call_operand.hbm [shape: f32[8,8], index: 0, kind: input, shape index: {}]
  %s1 = inlined_call_operand.hbm [shape: bf16[128,128], index: 1, kind: input, shape index: {}]
  %s2 = inlined_call_operand.hbm [shape: f32[8,16], index: 2, kind: input, shape index: {}]
  %s3 = inlined_call_operand.hbm [shape: f32[8,16], index: 3, kind: output, shape index: {}]
  %s4 = sld [smem:[#allocation0]]
  $region38: #{tpu_custom_call.1} parent=0
    _
  %s6 = ssub.s32 1, %s4
  %s7 = scalar_select 0, %s6, %s4
  $region1: #{tpu_custom_call.1} parent=0
    #allocation3 [shape = 'u8[4096]{0}', space=vmem, size = 0x1000, scoped, tag = 'input window, operand 0, single buffered']
    #allocation4 [shape = 's32[1]{0}', space=sflag, size = 0x4, scoped, tag = 'scoped memory for tpu_custom_call.1']
    #allocation5 [shape = 's32[1]{0}', space=sflag, size = 0x4, scoped, tag = 'scoped memory for tpu_custom_call.1']
    #allocation6 [shape = 'u8[32768]{0}', space=vmem, size = 0x8000, scoped, tag = 'input window, operand 1, single buffered']
    #allocation7 [shape = 's32[1]{0}', space=sflag, size = 0x4, scoped, tag = 'scoped memory for tpu_custom_call.1']
    #allocation8 [shape = 'u8[4096]{0}', space=vmem, size = 0x1000, scoped, tag = 'input window, operand 2, single buffered']
    #allocation9 [shape = 'u8[4096]{0}', space=vmem, size = 0x1000, scoped, tag = 'output window, operand 0, single buffered']
    %8 = vsyncpa [#allocation4], 0
    %9 = vsyncpa [#allocation7], 0
    %10 = vsyncpa [#allocation5], 0
    // Predicated region
    $region2: #{tpu_custom_call.1} parent=1 // pred_check
      _
    $region3: #{tpu_custom_call.1} parent=1 // pred_check_branch
      %12 = sbr.rel (0) target = $region5
    $region4: #{tpu_custom_call.1} parent=1 // pred_region
      %s14 = ssub.s32 128, 128
      %15 = vsyncadd [#allocation4], %s14
      %s17 = sshll.u32 [#allocation3], 4
      %s18 = int_to_ptr.vmem [resolvable:$true] %s17
      %20 = dma.hbm_to_vmem [thread:$0]  %s0, 128, %s18, [#allocation4]
    $region5: #{tpu_custom_call.1} parent=1 // pred_fallthru
      _
    // Predicated region
    $region6: #{tpu_custom_call.1} parent=1 // pred_check
      _
    $region7: #{tpu_custom_call.1} parent=1 // pred_check_branch
      %22 = sbr.rel (0) target = $region9
    $region8: #{tpu_custom_call.1} parent=1 // pred_region
      %s24 = ssub.s32 1024, 1024
      %25 = vsyncadd [#allocation7], %s24
      %s26 = sshll.u32 [#allocation6], 4
      %s27 = int_to_ptr.vmem [resolvable:$true] %s26
      %32 = dma.hbm_to_vmem [thread:$0]  %s1, 1024, %s27, [#allocation7], 64, 64, 4
    $region9: #{tpu_custom_call.1} parent=1 // pred_fallthru
      _
    // Predicated region
    $region10: #{tpu_custom_call.1} parent=1 // pred_check
      _
    $region11: #{tpu_custom_call.1} parent=1 // pred_check_branch
      %34 = sbr.rel (0) target = $region13
    $region12: #{tpu_custom_call.1} parent=1 // pred_region
      %s36 = ssub.s32 128, 128
      %37 = vsyncadd [#allocation7], %s36
      %s39 = sshll.u32 [#allocation8], 4
      %s40 = int_to_ptr.vmem [resolvable:$true] %s39
      %42 = dma.hbm_to_vmem [thread:$0]  %s2, 128, %s40, [#allocation7]
    $region13: #{tpu_custom_call.1} parent=1 // pred_fallthru
      _
    // Predicated region
    $region14: #{tpu_custom_call.1} parent=1 // pred_check
      _
    $region15: #{tpu_custom_call.1} parent=1 // pred_check_branch
      %44 = sbr.rel (0) target = $region17
    $region16: #{tpu_custom_call.1} parent=1 // pred_region
      %45 = dma.done [#allocation4], 128
    $region17: #{tpu_custom_call.1} parent=1 // pred_fallthru
      _
    // Predicated region
    $region18: #{tpu_custom_call.1} parent=1 // pred_check
      _
    $region19: #{tpu_custom_call.1} parent=1 // pred_check_branch
      %47 = sbr.rel (0) target = $region21
    $region20: #{tpu_custom_call.1} parent=1 // pred_region
      %48 = dma.done [#allocation7], 1024
    $region21: #{tpu_custom_call.1} parent=1 // pred_fallthru
      _
    // Predicated region
    $region22: #{tpu_custom_call.1} parent=1 // pred_check
      _
    $region23: #{tpu_custom_call.1} parent=1 // pred_check_branch
      %50 = sbr.rel (0) target = $region25
    $region24: #{tpu_custom_call.1} parent=1 // pred_region
      %51 = dma.done [#allocation7], 128
    $region25: #{tpu_custom_call.1} parent=1 // pred_fallthru
      _
    %p53 = scmp.eq.s32.totalorder 0, 0
    // Predicated region
    $region26: #{tpu_custom_call.1} parent=1 // pred_check
      %p54 = pneg %p53
    $region27: #{tpu_custom_call.1} parent=1 // pred_check_branch
      %56 = sbr.rel (%p54) target = $region29
    $region28: #{tpu_custom_call.1} parent=1 // pred_region
      %vm57 = vcmask 7168
      %58 = vst.msk [vmem:[#allocation2] sm:$0xff] %vm57, 0.0
    $region29: #{tpu_custom_call.1} parent=1 // pred_fallthru
      _
    %v59 = vld [vmem:[#allocation3] sm:$0xff]
    %v60 = vld [vmem:[#allocation6] sm:$0xf]
    %v61 = vld [vmem:[#allocation6 + $0x4] sm:$0xf]
    %v62 = vlaneseq
    %v63 = vand.u32 %v62, 127
    %v64 = vld [vmem:[#allocation2] sm:$0xff]
    %s65 = smul.u32 0, 16
    %v66 = vld [vmem:[#allocation8] sm:$0xff]
    %v67 = vmax.f32 %v66, 0.0
    %v68 = vstv %s65
    %v69 = vadd.s32 %v63, %v68
    %v70 = vcvt.s32.f32 %v69
    %72 = vset.pattern.permute.xlu0 0
    %73 = vperm.xlu0 %72, %v59
    %v74 = vpop.permute.xlu0 %73
    %v76 = vmul.f32 %v70, %v74
    %v77 = vmul.f32 %v76, 1.442695
    %v78 = vpow.pop %v77
    %v79 = vmul.f32 %v67, %v78
    %v80 = vpack.c.bf16 %v79, %v79
    %v81 = vunpack.c.l.bf16 %v80
    %v82 = vsub.f32 %v79, %v81
    %v83 = vpack.c.bf16 %v82, %v82
    %v86 = vunpack.c.l.b16 %v60
    %v87 = vunpack.c.l.b16 %v61
    %v88 = vpack.c.b16 %v87, %v86
    %vm90 = vcmask 130048
    %v92 = vsel %vm90, %v83, 0
    %94 = vmatprep.subr.bf16.mxu0 0
    %95 = vmatpush1.bf16.msra.mxu0 %v88
    %96 = vmatprep.subr.bf16.mxu0 0
    %97 = vmatpush1.bf16.msra.mxu0 0
    %98 = vmatprep.subr.bf16.mxu0 0
    %99 = vmatpush1.bf16.msra.mxu0 0
    %100 = vmatprep.subr.bf16.mxu0 0
    %101 = vmatpush1.bf16.msra.mxu0 0
    %102 = vmatprep.subr.bf16.mxu0 0
    %103 = vmatpush1.bf16.msra.mxu0 0
    %104 = vmatprep.subr.bf16.mxu0 0
    %105 = vmatpush1.bf16.msra.mxu0 0
    %106 = vmatprep.subr.bf16.mxu0 0
    %107 = vmatpush1.bf16.msra.mxu0 0
    %108 = vmatprep.subr.bf16.mxu0 0
    %109 = vmatpush1.bf16.msra.mxu0 0
    %110 = vmatprep.subr.bf16.mxu0 0
    %111 = vmatpush1.bf16.msra.mxu0 0
    %112 = vmatprep.subr.bf16.mxu0 0
    %113 = vmatpush1.bf16.msra.mxu0 0
    %114 = vmatprep.subr.bf16.mxu0 0
    %115 = vmatpush1.bf16.msra.mxu0 0
    %116 = vmatprep.subr.bf16.mxu0 0
    %117 = vmatpush1.bf16.msra.mxu0 0
    %118 = vmatprep.subr.bf16.mxu0 0
    %119 = vmatpush1.bf16.msra.mxu0 0
    %120 = vmatprep.subr.bf16.mxu0 0
    %121 = vmatpush1.bf16.msra.mxu0 0
    %122 = vmatprep.subr.bf16.mxu0 0
    %123 = vmatpush1.bf16.msra.mxu0 0
    %124 = vmatprep.subr.bf16.mxu0 0
    %125 = vmatpush1.bf16.msra.mxu0 0
    %126 = vmatprep.mubr.bf16.mxu0 0
    %127 = vmatmul.mubr.bf16.gmra.mrb[0].mxu0 %v92
    %v128 = vpop.f32.mrb[0].mxu0
    %v129 = vadd.f32 0.0, %v128
    %v130 = vpop.f32.mrb[0].mxu0
    %v131 = vpop.f32.mrb[0].mxu0
    %v132 = vpop.f32.mrb[0].mxu0
    %133 = vdwg.mxu0
    %v135 = vsel %vm90, %v80, 0
    %137 = vmatprep.subr.bf16.mxu0 0
    %138 = vmatpush1.bf16.msra.mxu0 %v88
    %139 = vmatprep.subr.bf16.mxu0 0
    %140 = vmatpush1.bf16.msra.mxu0 0
    %141 = vmatprep.subr.bf16.mxu0 0
    %142 = vmatpush1.bf16.msra.mxu0 0
    %143 = vmatprep.subr.bf16.mxu0 0
    %144 = vmatpush1.bf16.msra.mxu0 0
    %145 = vmatprep.subr.bf16.mxu0 0
    %146 = vmatpush1.bf16.msra.mxu0 0
    %147 = vmatprep.subr.bf16.mxu0 0
    %148 = vmatpush1.bf16.msra.mxu0 0
    %149 = vmatprep.subr.bf16.mxu0 0
    %150 = vmatpush1.bf16.msra.mxu0 0
    %151 = vmatprep.subr.bf16.mxu0 0
    %152 = vmatpush1.bf16.msra.mxu0 0
    %153 = vmatprep.subr.bf16.mxu0 0
    %154 = vmatpush1.bf16.msra.mxu0 0
    %155 = vmatprep.subr.bf16.mxu0 0
    %156 = vmatpush1.bf16.msra.mxu0 0
    %157 = vmatprep.subr.bf16.mxu0 0
    %158 = vmatpush1.bf16.msra.mxu0 0
    %159 = vmatprep.subr.bf16.mxu0 0
    %160 = vmatpush1.bf16.msra.mxu0 0
    %161 = vmatprep.subr.bf16.mxu0 0
    %162 = vmatpush1.bf16.msra.mxu0 0
    %163 = vmatprep.subr.bf16.mxu0 0
    %164 = vmatpush1.bf16.msra.mxu0 0
    %165 = vmatprep.subr.bf16.mxu0 0
    %166 = vmatpush1.bf16.msra.mxu0 0
    %167 = vmatprep.subr.bf16.mxu0 0
    %168 = vmatpush1.bf16.msra.mxu0 0
    %169 = vmatprep.mubr.bf16.mxu0 0
    %170 = vmatmul.mubr.bf16.gmra.mrb[0].mxu0 %v135
    %v171 = vpop.f32.mrb[0].mxu0
    %v172 = vadd.f32 %v129, %v171
    %v173 = vpop.f32.mrb[0].mxu0
    %v174 = vpop.f32.mrb[0].mxu0
    %v175 = vpop.f32.mrb[0].mxu0
    %176 = vdwg.mxu0
    %178 = vset.pattern.permute.xlu0 0
    %179 = vperm.xlu0 %178, %v64
    %v180 = vpop.permute.xlu0 %179
    %v182 = vadd.f32 %v172, %v180
    %183 = vset.pattern.permute.xlu0 1
    %184 = vperm.xlu0 %183, %v59
    %v185 = vpop.permute.xlu0 %184
    %v187 = vmul.f32 %v78, %v185
    %v188 = vsub.f32 1.0, %v187
    %189 = vset.pattern.permute.xlu0 2
    %190 = vperm.xlu0 %189, %v59
    %v191 = vpop.permute.xlu0 %190
    %v193 = vmul.f32 %v188, %v191
    %v194 = vadd.f32 %v193, 1e-06
    %v195 = vrcp.pop %v194
    %v196 = vmul.f32 %v182, %v195
    %v197 = vsub.f32 0.0, %v59
    %v198 = vadd.f32 %v196, 1e-06
    %v199 = vlog2.pop %v198
    %v200 = vmul.f32 %v199, 0.6931472
    %202 = vset.pattern.permute.xlu0 3
    %203 = vperm.xlu0 %202, %v197
    %v204 = vpop.permute.xlu0 %203
    %v206 = vmul.f32 %v204, %v200
    %v207 = vmul.f32 %v206, 1.442695
    %v208 = vpow.pop %v207
    %v209 = vmul.f32 %v67, %v208
    %210 = vset.pattern.permute.xlu0 4
    %211 = vperm.xlu0 %210, %v59
    %v212 = vpop.permute.xlu0 %211
    %v214 = vadd.f32 %v209, %v212
    %v215 = vlog2.pop %v214
    %v216 = vmul.f32 %v215, 0.6931472
    %217 = vset.pattern.permute.xlu0 5
    %218 = vperm.xlu0 %217, %v59
    %v219 = vpop.permute.xlu0 %218
    %v221 = vmul.f32 %v219, %v216
    %v222 = vmul.f32 %v221, 1.442695
    %v223 = vpow.pop %v222
    %224 = vset.pattern.permute.xlu0 6
    %225 = vperm.xlu0 %224, %v59
    %v226 = vpop.permute.xlu0 %225
    %v228 = vsub.f32 %v223, %v226
    %229 = vst.msk [vmem:[#allocation9] sm:$0xff] %vm90, %v228
    %231 = vrot.lane.b32.xlu0 %v182, 113
    %v232 = vpop.permute.xlu0 %231
    %vm234 = vcmask 7168
    %235 = vst.msk [vmem:[#allocation2] sm:$0xff] %vm234, %v232
    // Predicated region
    $region30: #{tpu_custom_call.1} parent=1 // pred_check
      _
    $region31: #{tpu_custom_call.1} parent=1 // pred_check_branch
      %237 = sbr.rel (0) target = $region33
    $region32: #{tpu_custom_call.1} parent=1 // pred_region
      %s239 = ssub.s32 128, 128
      %240 = vsyncadd [#allocation5], %s239
      %s242 = sshll.u32 [#allocation9], 4
      %s243 = int_to_ptr.vmem [resolvable:$true] %s242
      %245 = dma.vmem_to_hbm [thread:$0]  %s243, 128, %s3, [#allocation5]
    $region33: #{tpu_custom_call.1} parent=1 // pred_fallthru
      _
    // Predicated region
    $region34: #{tpu_custom_call.1} parent=1 // pred_check
      _
    $region35: #{tpu_custom_call.1} parent=1 // pred_check_branch
      %247 = sbr.rel (0) target = $region37
    $region36: #{tpu_custom_call.1} parent=1 // pred_region
      %248 = dma.done [#allocation5], 128
    $region37: #{tpu_custom_call.1} parent=1 // pred_fallthru
      _
    %249 = vsyncpa [#allocation4], 1
    %250 = vsyncpa [#allocation7], 1
    %251 = vsyncpa [#allocation5], 1

</llo_original>
